<compile_context>
chip_gen: v7x
topology: tpu7x:2x2x1
jax: 0.10.0
libtpu: 0.0.40
codegen_flags: <defaults>
</compile_context>

<pallas_src>
import math
import jax
import jax.numpy as jnp
from jax.experimental import pallas as pl
from jax.experimental.pallas import tpu as pltpu

# ----------------------------- model config --------------------------------
dropout_rate = 0.1          # identity in eval mode
l1_penalty = 0.05           # loss-only, unused in forward
latent_dim = 4
input_dim = 16
layer_sizes = [16, 12, 10, 8, 6]
target_sparsity = 0.35      # loss-only, unused in forward
BN_EPS = 1e-5


def _make_layer_cfg():
    # (d_in, d_out, has_bn, has_relu) per Linear layer, in execution order.
    cfg = []
    for i in range(len(layer_sizes) - 1):                        # encoder hidden
        cfg.append((layer_sizes[i], layer_sizes[i + 1], True, True))
    cfg.append((layer_sizes[-1], latent_dim, False, True))       # -> encoded
    cfg.append((latent_dim, layer_sizes[-1], False, True))       # decoder first
    for i in range(len(layer_sizes) - 1, 0, -1):
        if i > 1:
            cfg.append((layer_sizes[i], layer_sizes[i - 1], True, True))
        else:
            cfg.append((layer_sizes[i], layer_sizes[i - 1], False, False))
    return tuple(cfg)


LAYER_CFG = _make_layer_cfg()            # 10 layers
NUM_LAYERS = len(LAYER_CFG)
ENC_LAYER_IDX = len(layer_sizes) - 1     # output of layer 4 == encoded
RELU_FLAGS = tuple(c[3] for c in LAYER_CFG)

# Augmented feature dimension: 16 feature rows + 1 constant-one row (carries the
# bias through the matmul), padded up to a multiple of 8 sublanes.
D_AUG = 24
ONE_ROW = 16
ENC_PAD = 8        # encoded (4 rows) padded to 8 sublanes in the kernel output


# ------------------------------- kernel ------------------------------------
def sparse_ae_kernel(x_ref, w_ref, dec_ref, enc_ref):
    # x_ref: (D_AUG, block_n)  -- batch on lanes, augmented features on sublanes
    # w_ref: (NUM_LAYERS, D_AUG, D_AUG) packed, BN+bias folded, resident in VMEM
    h = x_ref[...]
    for l in range(NUM_LAYERS):                       # unrolled at trace time
        h = jnp.dot(w_ref[l], h, preferred_element_type=jnp.float32)
        if RELU_FLAGS[l]:
            h = jnp.maximum(h, 0.0)
        if l == ENC_LAYER_IDX:
            enc_ref[...] = h[:ENC_PAD, :]             # rows 0:4 real, 4:8 zero
    dec_ref[...] = h[:input_dim, :]


# ------------------------------ params --------------------------------------
def init_raw_params(key):
    """PyTorch-style fan_in uniform Linear init + randomized eval-mode BN stats."""
    params = []
    for (d_in, d_out, has_bn, _) in LAYER_CFG:
        key, kw, kb = jax.random.split(key, 3)
        bound = 1.0 / math.sqrt(d_in)
        layer = {
            "w": jax.random.uniform(kw, (d_out, d_in), jnp.float32, -bound, bound),
            "b": jax.random.uniform(kb, (d_out,), jnp.float32, -bound, bound),
        }
        if has_bn:
            key, kg, kbt, km, kv = jax.random.split(key, 5)
            gamma = jax.random.uniform(kg, (d_out,), jnp.float32, 0.5, 1.5)
            beta = jax.random.uniform(kbt, (d_out,), jnp.float32, -0.1, 0.1)
            rmean = 0.1 * jax.random.normal(km, (d_out,), jnp.float32)
            rvar = jax.random.uniform(kv, (d_out,), jnp.float32, 0.5, 1.5)
            scale = gamma / jnp.sqrt(rvar + BN_EPS)
            layer["scale"] = scale
            layer["shift"] = beta - rmean * scale
        params.append(layer)
    return params


def pack_weight_slab(raw_params):
    """Fold eval-mode BN into W/b, fold b into an augmented column, pack all
    layers into a single (NUM_LAYERS, D_AUG, D_AUG) f32 slab."""
    slab = jnp.zeros((NUM_LAYERS, D_AUG, D_AUG), jnp.float32)
    for l, (layer, (d_in, d_out, has_bn, _)) in enumerate(zip(raw_params, LAYER_CFG)):
        w = layer["w"]                       # (d_out, d_in)
        b = layer["b"]                       # (d_out,)
        if has_bn:
            w = w * layer["scale"][:, None]
            b = b * layer["scale"] + layer["shift"]
        slab = slab.at[l, :d_out, :d_in].set(w)
        slab = slab.at[l, :d_out, ONE_ROW].set(b)      # bias column
        slab = slab.at[l, ONE_ROW, ONE_ROW].set(1.0)   # keep the ones-row alive
    return slab


# ------------------------------ wrapper --------------------------------------
def _round_up(x, m):
    return (x + m - 1) // m * m


def sparse_autoencoder_forward(x, w_slab, *, block_n=512):
    x = x.astype(jnp.float32)
    n = x.shape[0]
    bn = min(block_n, _round_up(n, 128))
    n_pad = _round_up(n, bn)

    # Transposed, augmented input slab: batch on lanes, ones-row for biases.
    x_t = jnp.zeros((D_AUG, n_pad), jnp.float32)
    x_t = x_t.at[:input_dim, :n].set(x.T)
    x_t = x_t.at[ONE_ROW, :].set(1.0)

    flops = 2 * n * sum(d_in * d_out for (d_in, d_out, _, _) in LAYER_CFG)
    bytes_accessed = 4 * (n * input_dim * 2 + n * latent_dim) + 4 * int(w_slab.size)

    dec_t, enc_t = pl.pallas_call(
        sparse_ae_kernel,
        grid=(n_pad // bn,),
        in_specs=[
            pl.BlockSpec((D_AUG, bn), lambda i: (0, i)),
            # Whole packed weight slab, constant index map -> fetched once.
            pl.BlockSpec((NUM_LAYERS, D_AUG, D_AUG), lambda i: (0, 0, 0)),
        ],
        out_specs=(
            pl.BlockSpec((input_dim, bn), lambda i: (0, i)),
            pl.BlockSpec((ENC_PAD, bn), lambda i: (0, i)),
        ),
        out_shape=(
            jax.ShapeDtypeStruct((input_dim, n_pad), jnp.float32),  # decoded.T
            jax.ShapeDtypeStruct((ENC_PAD, n_pad), jnp.float32),    # encoded.T (padded)
        ),
        compiler_params=pltpu.CompilerParams(dimension_semantics=("parallel",)),
        cost_estimate=pl.CostEstimate(
            flops=flops, transcendentals=0, bytes_accessed=bytes_accessed),
    )(x_t, w_slab)

    decoded = dec_t[:, :n].T
    encoded = enc_t[:latent_dim, :n].T
    return decoded, encoded


# ------------------------------ reference ------------------------------------
def reference_forward(x, raw_params):
    """Pure-JAX reference mirroring the PyTorch eval-mode forward (unfolded BN)."""
    h = x.astype(jnp.float32)
    encoded = None
    for l, (layer, (d_in, d_out, has_bn, has_relu)) in enumerate(zip(raw_params, LAYER_CFG)):
        h = jnp.dot(h, layer["w"].T, precision=jax.lax.Precision.HIGHEST) + layer["b"]
        if has_bn:
            h = h * layer["scale"] + layer["shift"]
        if has_relu:
            h = jnp.maximum(h, 0.0)
        if l == ENC_LAYER_IDX:
            encoded = h
    return h, encoded


# TODO(synk): loss_function / kl_divergence (KL sparsity penalty) are training-time
# losses, not part of forward(); dropout and BN batch-stats (train mode) are not modeled.

if __name__ == "__main__":
    key = jax.random.PRNGKey(0)
    key, kx, kp, kx2 = jax.random.split(key, 4)

    raw_params = init_raw_params(kp)
    w_slab = pack_weight_slab(raw_params)

    # Small single-block case.
    batch = 8
    x = jax.random.normal(kx, (batch, input_dim), jnp.float32)
    decoded, encoded = sparse_autoencoder_forward(x, w_slab)
    jax.block_until_ready((decoded, encoded))

    ref_dec, ref_enc = reference_forward(x, raw_params)
    assert decoded.shape == (batch, input_dim)
    assert encoded.shape == (batch, latent_dim)
    # BN/bias folding + MXU accumulation order change rounding slightly vs the
    # unfolded reference, so use a slightly relaxed (still meaningful) tolerance.
    assert jnp.allclose(decoded, ref_dec, atol=1e-4, rtol=1e-4)
    assert jnp.allclose(encoded, ref_enc, atol=1e-4, rtol=1e-4)

    # Multi-block case (exercises the parallel grid + lane padding path).
    batch2 = 200
    x2 = jax.random.normal(kx2, (batch2, input_dim), jnp.float32)
    dec2, enc2 = sparse_autoencoder_forward(x2, w_slab, block_n=128)
    jax.block_until_ready((dec2, enc2))
    ref_dec2, ref_enc2 = reference_forward(x2, raw_params)
    assert dec2.shape == (batch2, input_dim)
    assert enc2.shape == (batch2, latent_dim)
    assert jnp.allclose(dec2, ref_dec2, atol=1e-4, rtol=1e-4)
    assert jnp.allclose(enc2, ref_enc2, atol=1e-4, rtol=1e-4)

    print("KERNEL_OK")
</pallas_src>

<mosaic_0001>
module attributes {stable_mosaic.version = 11 : i64} {
  func.func @sparse_ae_kernel(%arg0: i32, %arg1: memref<24x128xf32, #tpu.memory_space<vmem>>, %arg2: memref<10x24x24xf32, #tpu.memory_space<vmem>>, %arg3: memref<16x128xf32, #tpu.memory_space<vmem>>, %arg4: memref<8x128xf32, #tpu.memory_space<vmem>>) attributes {dimension_semantics = [#tpu.dimension_semantics<parallel>], iteration_bounds = array<i64: 1>, scalar_prefetch = 0 : i64, scratch_operands = 0 : i64, tpu.core_type = #tpu.core_type<tc>, window_params = [{transform_indices = @transform_0, window_bounds = array<i64: 24, 128>}, {pipeline_mode = #tpu.pipeline_mode<synchronous>, transform_indices = @transform_1, window_bounds = array<i64: 10, 24, 24>}, {transform_indices = @transform_2, window_bounds = array<i64: 16, 128>}, {transform_indices = @transform_3, window_bounds = array<i64: 8, 128>}]} {
    %c0 = arith.constant 0 : index
    %c0_0 = arith.constant 0 : index
    %0 = vector.load %arg1[%c0, %c0_0] : memref<24x128xf32, #tpu.memory_space<vmem>>, vector<24x128xf32>
    %c0_1 = arith.constant 0 : index
    %c0_2 = arith.constant 0 : index
    %c0_3 = arith.constant 0 : index
    %1 = vector.load %arg2[%c0_1, %c0_2, %c0_3] : memref<10x24x24xf32, #tpu.memory_space<vmem>>, vector<1x24x24xf32>
    %2 = vector.shape_cast %1 : vector<1x24x24xf32> to vector<24x24xf32>
    %cst = arith.constant dense<0.000000e+00> : vector<24x128xf32>
    %3 = tpu.matmul %2, %0, %cst {dimension_numbers = #tpu.dot_dimension_numbers<[1], [0], [0], [1], [0, 0, 1, 1], [], []>} : vector<24x24xf32>, vector<24x128xf32>, vector<24x128xf32> -> vector<24x128xf32>
    %cst_4 = arith.constant 0.000000e+00 : f32
    %4 = vector.broadcast %cst_4 : f32 to vector<24x128xf32>
    %5 = arith.maximumf %3, %4 : vector<24x128xf32>
    %c1 = arith.constant 1 : index
    %c0_5 = arith.constant 0 : index
    %c0_6 = arith.constant 0 : index
    %6 = vector.load %arg2[%c1, %c0_5, %c0_6] : memref<10x24x24xf32, #tpu.memory_space<vmem>>, vector<1x24x24xf32>
    %7 = vector.shape_cast %6 : vector<1x24x24xf32> to vector<24x24xf32>
    %cst_7 = arith.constant dense<0.000000e+00> : vector<24x128xf32>
    %8 = tpu.matmul %7, %5, %cst_7 {dimension_numbers = #tpu.dot_dimension_numbers<[1], [0], [0], [1], [0, 0, 1, 1], [], []>} : vector<24x24xf32>, vector<24x128xf32>, vector<24x128xf32> -> vector<24x128xf32>
    %cst_8 = arith.constant 0.000000e+00 : f32
    %9 = vector.broadcast %cst_8 : f32 to vector<24x128xf32>
    %10 = arith.maximumf %8, %9 : vector<24x128xf32>
    %c2 = arith.constant 2 : index
    %c0_9 = arith.constant 0 : index
    %c0_10 = arith.constant 0 : index
    %11 = vector.load %arg2[%c2, %c0_9, %c0_10] : memref<10x24x24xf32, #tpu.memory_space<vmem>>, vector<1x24x24xf32>
    %12 = vector.shape_cast %11 : vector<1x24x24xf32> to vector<24x24xf32>
    %cst_11 = arith.constant dense<0.000000e+00> : vector<24x128xf32>
    %13 = tpu.matmul %12, %10, %cst_11 {dimension_numbers = #tpu.dot_dimension_numbers<[1], [0], [0], [1], [0, 0, 1, 1], [], []>} : vector<24x24xf32>, vector<24x128xf32>, vector<24x128xf32> -> vector<24x128xf32>
    %cst_12 = arith.constant 0.000000e+00 : f32
    %14 = vector.broadcast %cst_12 : f32 to vector<24x128xf32>
    %15 = arith.maximumf %13, %14 : vector<24x128xf32>
    %c3 = arith.constant 3 : index
    %c0_13 = arith.constant 0 : index
    %c0_14 = arith.constant 0 : index
    %16 = vector.load %arg2[%c3, %c0_13, %c0_14] : memref<10x24x24xf32, #tpu.memory_space<vmem>>, vector<1x24x24xf32>
    %17 = vector.shape_cast %16 : vector<1x24x24xf32> to vector<24x24xf32>
    %cst_15 = arith.constant dense<0.000000e+00> : vector<24x128xf32>
    %18 = tpu.matmul %17, %15, %cst_15 {dimension_numbers = #tpu.dot_dimension_numbers<[1], [0], [0], [1], [0, 0, 1, 1], [], []>} : vector<24x24xf32>, vector<24x128xf32>, vector<24x128xf32> -> vector<24x128xf32>
    %cst_16 = arith.constant 0.000000e+00 : f32
    %19 = vector.broadcast %cst_16 : f32 to vector<24x128xf32>
    %20 = arith.maximumf %18, %19 : vector<24x128xf32>
    %c4 = arith.constant 4 : index
    %c0_17 = arith.constant 0 : index
    %c0_18 = arith.constant 0 : index
    %21 = vector.load %arg2[%c4, %c0_17, %c0_18] : memref<10x24x24xf32, #tpu.memory_space<vmem>>, vector<1x24x24xf32>
    %22 = vector.shape_cast %21 : vector<1x24x24xf32> to vector<24x24xf32>
    %cst_19 = arith.constant dense<0.000000e+00> : vector<24x128xf32>
    %23 = tpu.matmul %22, %20, %cst_19 {dimension_numbers = #tpu.dot_dimension_numbers<[1], [0], [0], [1], [0, 0, 1, 1], [], []>} : vector<24x24xf32>, vector<24x128xf32>, vector<24x128xf32> -> vector<24x128xf32>
    %cst_20 = arith.constant 0.000000e+00 : f32
    %24 = vector.broadcast %cst_20 : f32 to vector<24x128xf32>
    %25 = arith.maximumf %23, %24 : vector<24x128xf32>
    %26 = vector.extract_strided_slice %25 {offsets = [0, 0], sizes = [8, 128], strides = [1, 1]} : vector<24x128xf32> to vector<8x128xf32>
    %c0_21 = arith.constant 0 : index
    %c0_22 = arith.constant 0 : index
    %27 = vector.load %arg4[%c0_21, %c0_22] : memref<8x128xf32, #tpu.memory_space<vmem>>, vector<8x128xf32>
    tpu.vector_store %arg4[%c0_21, %c0_22], %26 {strides = array<i32>} : memref<8x128xf32, #tpu.memory_space<vmem>>, vector<8x128xf32>,
    %c5 = arith.constant 5 : index
    %c0_23 = arith.constant 0 : index
    %c0_24 = arith.constant 0 : index
    %28 = vector.load %arg2[%c5, %c0_23, %c0_24] : memref<10x24x24xf32, #tpu.memory_space<vmem>>, vector<1x24x24xf32>
    %29 = vector.shape_cast %28 : vector<1x24x24xf32> to vector<24x24xf32>
    %cst_25 = arith.constant dense<0.000000e+00> : vector<24x128xf32>
    %30 = tpu.matmul %29, %25, %cst_25 {dimension_numbers = #tpu.dot_dimension_numbers<[1], [0], [0], [1], [0, 0, 1, 1], [], []>} : vector<24x24xf32>, vector<24x128xf32>, vector<24x128xf32> -> vector<24x128xf32>
    %cst_26 = arith.constant 0.000000e+00 : f32
    %31 = vector.broadcast %cst_26 : f32 to vector<24x128xf32>
    %32 = arith.maximumf %30, %31 : vector<24x128xf32>
    %c6 = arith.constant 6 : index
    %c0_27 = arith.constant 0 : index
    %c0_28 = arith.constant 0 : index
    %33 = vector.load %arg2[%c6, %c0_27, %c0_28] : memref<10x24x24xf32, #tpu.memory_space<vmem>>, vector<1x24x24xf32>
    %34 = vector.shape_cast %33 : vector<1x24x24xf32> to vector<24x24xf32>
    %cst_29 = arith.constant dense<0.000000e+00> : vector<24x128xf32>
    %35 = tpu.matmul %34, %32, %cst_29 {dimension_numbers = #tpu.dot_dimension_numbers<[1], [0], [0], [1], [0, 0, 1, 1], [], []>} : vector<24x24xf32>, vector<24x128xf32>, vector<24x128xf32> -> vector<24x128xf32>
    %cst_30 = arith.constant 0.000000e+00 : f32
    %36 = vector.broadcast %cst_30 : f32 to vector<24x128xf32>
    %37 = arith.maximumf %35, %36 : vector<24x128xf32>
    %c7 = arith.constant 7 : index
    %c0_31 = arith.constant 0 : index
    %c0_32 = arith.constant 0 : index
    %38 = vector.load %arg2[%c7, %c0_31, %c0_32] : memref<10x24x24xf32, #tpu.memory_space<vmem>>, vector<1x24x24xf32>
    %39 = vector.shape_cast %38 : vector<1x24x24xf32> to vector<24x24xf32>
    %cst_33 = arith.constant dense<0.000000e+00> : vector<24x128xf32>
    %40 = tpu.matmul %39, %37, %cst_33 {dimension_numbers = #tpu.dot_dimension_numbers<[1], [0], [0], [1], [0, 0, 1, 1], [], []>} : vector<24x24xf32>, vector<24x128xf32>, vector<24x128xf32> -> vector<24x128xf32>
    %cst_34 = arith.constant 0.000000e+00 : f32
    %41 = vector.broadcast %cst_34 : f32 to vector<24x128xf32>
    %42 = arith.maximumf %40, %41 : vector<24x128xf32>
    %c8 = arith.constant 8 : index
    %c0_35 = arith.constant 0 : index
    %c0_36 = arith.constant 0 : index
    %43 = vector.load %arg2[%c8, %c0_35, %c0_36] : memref<10x24x24xf32, #tpu.memory_space<vmem>>, vector<1x24x24xf32>
    %44 = vector.shape_cast %43 : vector<1x24x24xf32> to vector<24x24xf32>
    %cst_37 = arith.constant dense<0.000000e+00> : vector<24x128xf32>
    %45 = tpu.matmul %44, %42, %cst_37 {dimension_numbers = #tpu.dot_dimension_numbers<[1], [0], [0], [1], [0, 0, 1, 1], [], []>} : vector<24x24xf32>, vector<24x128xf32>, vector<24x128xf32> -> vector<24x128xf32>
    %cst_38 = arith.constant 0.000000e+00 : f32
    %46 = vector.broadcast %cst_38 : f32 to vector<24x128xf32>
    %47 = arith.maximumf %45, %46 : vector<24x128xf32>
    %c9 = arith.constant 9 : index
    %c0_39 = arith.constant 0 : index
    %c0_40 = arith.constant 0 : index
    %48 = vector.load %arg2[%c9, %c0_39, %c0_40] : memref<10x24x24xf32, #tpu.memory_space<vmem>>, vector<1x24x24xf32>
    %49 = vector.shape_cast %48 : vector<1x24x24xf32> to vector<24x24xf32>
    %cst_41 = arith.constant dense<0.000000e+00> : vector<24x128xf32>
    %50 = tpu.matmul %49, %47, %cst_41 {dimension_numbers = #tpu.dot_dimension_numbers<[1], [0], [0], [1], [0, 0, 1, 1], [], []>} : vector<24x24xf32>, vector<24x128xf32>, vector<24x128xf32> -> vector<24x128xf32>
    %51 = vector.extract_strided_slice %50 {offsets = [0, 0], sizes = [16, 128], strides = [1, 1]} : vector<24x128xf32> to vector<16x128xf32>
    %c0_42 = arith.constant 0 : index
    %c0_43 = arith.constant 0 : index
    %52 = vector.load %arg3[%c0_42, %c0_43] : memref<16x128xf32, #tpu.memory_space<vmem>>, vector<16x128xf32>
    tpu.vector_store %arg3[%c0_42, %c0_43], %51 {strides = array<i32>} : memref<16x128xf32, #tpu.memory_space<vmem>>, vector<16x128xf32>,
    return
  }
  func.func @transform_0(%arg0: i32) -> (i32, i32) {
    %c0_i32 = arith.constant 0 : i32
    %c0_i32_0 = arith.constant 0 : i32
    return %c0_i32, %arg0 : i32, i32
  }
  func.func @transform_1(%arg0: i32) -> (i32, i32, i32) {
    %c0_i32 = arith.constant 0 : i32
    %c0_i32_0 = arith.constant 0 : i32
    %c0_i32_1 = arith.constant 0 : i32
    %c0_i32_2 = arith.constant 0 : i32
    return %c0_i32, %c0_i32_0, %c0_i32_1 : i32, i32, i32
  }
  func.func @transform_2(%arg0: i32) -> (i32, i32) {
    %c0_i32 = arith.constant 0 : i32
    %c0_i32_0 = arith.constant 0 : i32
    return %c0_i32, %arg0 : i32, i32
  }
  func.func @transform_3(%arg0: i32) -> (i32, i32) {
    %c0_i32 = arith.constant 0 : i32
    %c0_i32_0 = arith.constant 0 : i32
    return %c0_i32, %arg0 : i32, i32
  }
}

</mosaic_0001>

<llo_original>
// kernel: tpu_custom_call.1
$region0: #{tpu_custom_call.1}
  #allocation0 [shape = 'u32[]', space=smem, size = 0x4, offset = 0x4, fixed_abs, tag = 'smem constant byte address 0x4 - core index']
  #allocation1 [shape = 'u32[144,128]{1,0:T(1,128)}', space=vmem, size = 0x12000, scoped, tag = 'internal scratch']
  %s0 = inlined_call_operand.hbm [shape: f32[24,128], index: 0, kind: input, shape index: {}]
  %s1 = inlined_call_operand.hbm [shape: f32[10,24,24], index: 1, kind: input, shape index: {}]
  %s2 = inlined_call_operand.hbm [shape: f32[16,128], index: 2, kind: output, shape index: {0}]
  %s3 = inlined_call_operand.hbm [shape: f32[8,128], index: 3, kind: output, shape index: {1}]
  %4 = xla_tuple %s2, %s3
  %s5 = sld [smem:[#allocation0]]
  $region34: #{tpu_custom_call.1} parent=0
    _
  %s7 = ssub.s32 1, %s5
  %s8 = scalar_select 0, %s7, %s5
  $region1: #{tpu_custom_call.1} parent=0
    #allocation2 [shape = 'u8[12288]{0}', space=vmem, size = 0x3000, scoped, tag = 'input window, operand 0, single buffered']
    #allocation3 [shape = 's32[1]{0}', space=sflag, size = 0x4, scoped, tag = 'scoped memory for tpu_custom_call.1']
    #allocation4 [shape = 's32[1]{0}', space=sflag, size = 0x4, scoped, tag = 'scoped memory for tpu_custom_call.1']
    #allocation5 [shape = 'u8[122880]{0}', space=vmem, size = 0x1e000, scoped, tag = 'input window, operand 1, single buffered']
    #allocation6 [shape = 's32[1]{0}', space=sflag, size = 0x4, scoped, tag = 'scoped memory for tpu_custom_call.1']
    #allocation7 [shape = 'u8[8192]{0}', space=vmem, size = 0x2000, scoped, tag = 'output window, operand 0, single buffered']
    #allocation8 [shape = 'u8[4096]{0}', space=vmem, size = 0x1000, scoped, tag = 'output window, operand 1, single buffered']
    #allocation9 [shape = 's32[1]{0}', space=sflag, size = 0x4, scoped, tag = 'scoped memory for tpu_custom_call.1']
    %9 = vsyncpa [#allocation3], 0
    %10 = vsyncpa [#allocation6], 0
    %11 = vsyncpa [#allocation4], 0
    %12 = vsyncpa [#allocation9], 0
    // Predicated region
    $region2: #{tpu_custom_call.1} parent=1 // pred_check
      _
    $region3: #{tpu_custom_call.1} parent=1 // pred_check_branch
      %14 = sbr.rel (0) target = $region5
    $region4: #{tpu_custom_call.1} parent=1 // pred_region
      %s16 = ssub.s32 384, 384
      %17 = vsyncadd [#allocation3], %s16
      %s18 = sshll.u32 [#allocation2], 4
      %s19 = int_to_ptr.vmem [resolvable:$true] %s18
      %24 = dma.hbm_to_vmem [thread:$0]  %s0, 384, %s19, [#allocation3], 128, 128, 8
    $region5: #{tpu_custom_call.1} parent=1 // pred_fallthru
      _
    // Predicated region
    $region6: #{tpu_custom_call.1} parent=1 // pred_check
      _
    $region7: #{tpu_custom_call.1} parent=1 // pred_check_branch
      %26 = sbr.rel (0) target = $region9
    $region8: #{tpu_custom_call.1} parent=1 // pred_region
      %s28 = ssub.s32 3840, 3840
      %29 = vsyncadd [#allocation6], %s28
      %s30 = sshll.u32 [#allocation5], 4
      %s31 = int_to_ptr.vmem [resolvable:$true] %s30
      %36 = dma.hbm_to_vmem [thread:$0]  %s1, 3840, %s31, [#allocation6], 128, 128, 8
    $region9: #{tpu_custom_call.1} parent=1 // pred_fallthru
      _
    // Predicated region
    $region10: #{tpu_custom_call.1} parent=1 // pred_check
      _
    $region11: #{tpu_custom_call.1} parent=1 // pred_check_branch
      %38 = sbr.rel (0) target = $region13
    $region12: #{tpu_custom_call.1} parent=1 // pred_region
      %39 = dma.done [#allocation3], 384
    $region13: #{tpu_custom_call.1} parent=1 // pred_fallthru
      _
    // Predicated region
    $region14: #{tpu_custom_call.1} parent=1 // pred_check
      _
    $region15: #{tpu_custom_call.1} parent=1 // pred_check_branch
      %41 = sbr.rel (0) target = $region17
    $region16: #{tpu_custom_call.1} parent=1 // pred_region
      %42 = dma.done [#allocation6], 3840
    $region17: #{tpu_custom_call.1} parent=1 // pred_fallthru
      _
    %v43 = vld [vmem:[#allocation2] sm:$0xff]
    %v44 = vld [vmem:[#allocation2 + $0x8] sm:$0xff]
    %v45 = vld [vmem:[#allocation2 + $0x10] sm:$0xff]
    %v46 = vld [vmem:[#allocation5] sm:$0xff]
    %v47 = vld [vmem:[#allocation5 + $0x8] sm:$0xff]
    %v48 = vld [vmem:[#allocation5 + $0x10] sm:$0xff]
    %vm49 = vcmask 195584
    %v51 = vsel %vm49, %v46, 0
    %v54 = vsel %vm49, %v47, 0
    %v57 = vsel %vm49, %v48, 0
    %59 = vmatprep.subr.mxu0 0.0
    %60 = vmatpush1.msra.mxu0 %v43
    %61 = vmatprep.subr.mxu0 0.0
    %62 = vmatpush1.msra.mxu0 %v44
    %63 = vmatprep.subr.mxu0 0.0
    %64 = vmatpush1.msra.mxu0 %v45
    %65 = vmatprep.subr.mxu0 0.0
    %66 = vmatpush1.msra.mxu0 0.0
    %67 = vmatprep.subr.mxu0 0.0
    %68 = vmatpush1.msra.mxu0 0.0
    %69 = vmatprep.subr.mxu0 0.0
    %70 = vmatpush1.msra.mxu0 0.0
    %71 = vmatprep.subr.mxu0 0.0
    %72 = vmatpush1.msra.mxu0 0.0
    %73 = vmatprep.subr.mxu0 0.0
    %74 = vmatpush1.msra.mxu0 0.0
    %75 = vmatprep.subr.mxu0 0.0
    %76 = vmatpush1.msra.mxu0 0.0
    %77 = vmatprep.subr.mxu0 0.0
    %78 = vmatpush1.msra.mxu0 0.0
    %79 = vmatprep.subr.mxu0 0.0
    %80 = vmatpush1.msra.mxu0 0.0
    %81 = vmatprep.subr.mxu0 0.0
    %82 = vmatpush1.msra.mxu0 0.0
    %83 = vmatprep.subr.mxu0 0.0
    %84 = vmatpush1.msra.mxu0 0.0
    %85 = vmatprep.subr.mxu0 0.0
    %86 = vmatpush1.msra.mxu0 0.0
    %87 = vmatprep.subr.mxu0 0.0
    %88 = vmatpush1.msra.mxu0 0.0
    %89 = vmatprep.subr.mxu0 0.0
    %90 = vmatpush1.msra.mxu0 0.0
    %91 = vmatprep.subr.mxu0 0.0
    %92 = vmatpush1.msra.mxu0 0.0
    %93 = vmatprep.subr.mxu0 0.0
    %94 = vmatpush1.msra.mxu0 0.0
    %95 = vmatprep.subr.mxu0 0.0
    %96 = vmatpush1.msra.mxu0 0.0
    %97 = vmatprep.subr.mxu0 0.0
    %98 = vmatpush1.msra.mxu0 0.0
    %99 = vmatprep.subr.mxu0 0.0
    %100 = vmatpush1.msra.mxu0 0.0
    %101 = vmatprep.subr.mxu0 0.0
    %102 = vmatpush1.msra.mxu0 0.0
    %103 = vmatprep.subr.mxu0 0.0
    %104 = vmatpush1.msra.mxu0 0.0
    %105 = vmatprep.subr.mxu0 0.0
    %106 = vmatpush1.msra.mxu0 0.0
    %107 = vmatprep.subr.mxu0 0.0
    %108 = vmatpush1.msra.mxu0 0.0
    %109 = vmatprep.subr.mxu0 0.0
    %110 = vmatpush1.msra.mxu0 0.0
    %111 = vmatprep.subr.mxu0 0.0
    %112 = vmatpush1.msra.mxu0 0.0
    %113 = vmatprep.subr.mxu0 0.0
    %114 = vmatpush1.msra.mxu0 0.0
    %115 = vmatprep.subr.mxu0 0.0
    %116 = vmatpush1.msra.mxu0 0.0
    %117 = vmatprep.subr.mxu0 0.0
    %118 = vmatpush1.msra.mxu0 0.0
    %119 = vmatprep.subr.mxu0 0.0
    %120 = vmatpush1.msra.mxu0 0.0
    %121 = vmatprep.subr.mxu0 0.0
    %122 = vmatpush1.msra.mxu0 0.0
    %123 = vmatprep.mubr.f32.mxu0 0.0
    %124 = vmatmul.mubr.f32.gmra.mrb[0].mxu0 %v51
    %v125 = vpop.f32.mrb[0].mxu0
    %v126 = vadd.f32 0.0, %v125
    %v127 = vpop.f32.mrb[0].mxu0
    %128 = vmatprep.mubr.f32.mxu0 0.0
    %129 = vmatmul.mubr.f32.gmra.mrb[0].mxu0 %v54
    %v130 = vpop.f32.mrb[0].mxu0
    %v131 = vadd.f32 0.0, %v130
    %v132 = vpop.f32.mrb[0].mxu0
    %133 = vmatprep.mubr.f32.mxu0 0.0
    %134 = vmatmul.mubr.f32.gmra.mrb[0].mxu0 %v57
    %v135 = vpop.f32.mrb[0].mxu0
    %v136 = vadd.f32 0.0, %v135
    %v137 = vpop.f32.mrb[0].mxu0
    %138 = vdwg.mxu0
    %v139 = vmax.f32 %v126, 0.0
    %v140 = vmax.f32 %v131, 0.0
    %v141 = vmax.f32 %v136, 0.0
    %s142 = scalar_lea.vmem [#allocation5], 24
    %v143 = vld [vmem:[%s142] sm:$0xff]
    %v144 = vld [vmem:[%s142 + $0x8] sm:$0xff]
    %v145 = vld [vmem:[%s142 + $0x10] sm:$0xff]
    %v147 = vsel %vm49, %v143, 0
    %v150 = vsel %vm49, %v144, 0
    %v153 = vsel %vm49, %v145, 0
    %155 = vmatprep.subr.mxu0 0.0
    %156 = vmatpush1.msra.mxu0 %v139
    %157 = vmatprep.subr.mxu0 0.0
    %158 = vmatpush1.msra.mxu0 %v140
    %159 = vmatprep.subr.mxu0 0.0
    %160 = vmatpush1.msra.mxu0 %v141
    %161 = vmatprep.subr.mxu0 0.0
    %162 = vmatpush1.msra.mxu0 0.0
    %163 = vmatprep.subr.mxu0 0.0
    %164 = vmatpush1.msra.mxu0 0.0
    %165 = vmatprep.subr.mxu0 0.0
    %166 = vmatpush1.msra.mxu0 0.0
    %167 = vmatprep.subr.mxu0 0.0
    %168 = vmatpush1.msra.mxu0 0.0
    %169 = vmatprep.subr.mxu0 0.0
    %170 = vmatpush1.msra.mxu0 0.0
    %171 = vmatprep.subr.mxu0 0.0
    %172 = vmatpush1.msra.mxu0 0.0
    %173 = vmatprep.subr.mxu0 0.0
    %174 = vmatpush1.msra.mxu0 0.0
    %175 = vmatprep.subr.mxu0 0.0
    %176 = vmatpush1.msra.mxu0 0.0
    %177 = vmatprep.subr.mxu0 0.0
    %178 = vmatpush1.msra.mxu0 0.0
    %179 = vmatprep.subr.mxu0 0.0
    %180 = vmatpush1.msra.mxu0 0.0
    %181 = vmatprep.subr.mxu0 0.0
    %182 = vmatpush1.msra.mxu0 0.0
    %183 = vmatprep.subr.mxu0 0.0
    %184 = vmatpush1.msra.mxu0 0.0
    %185 = vmatprep.subr.mxu0 0.0
    %186 = vmatpush1.msra.mxu0 0.0
    %187 = vmatprep.subr.mxu0 0.0
    %188 = vmatpush1.msra.mxu0 0.0
    %189 = vmatprep.subr.mxu0 0.0
    %190 = vmatpush1.msra.mxu0 0.0
    %191 = vmatprep.subr.mxu0 0.0
    %192 = vmatpush1.msra.mxu0 0.0
    %193 = vmatprep.subr.mxu0 0.0
    %194 = vmatpush1.msra.mxu0 0.0
    %195 = vmatprep.subr.mxu0 0.0
    %196 = vmatpush1.msra.mxu0 0.0
    %197 = vmatprep.subr.mxu0 0.0
    %198 = vmatpush1.msra.mxu0 0.0
    %199 = vmatprep.subr.mxu0 0.0
    %200 = vmatpush1.msra.mxu0 0.0
    %201 = vmatprep.subr.mxu0 0.0
    %202 = vmatpush1.msra.mxu0 0.0
    %203 = vmatprep.subr.mxu0 0.0
    %204 = vmatpush1.msra.mxu0 0.0
    %205 = vmatprep.subr.mxu0 0.0
    %206 = vmatpush1.msra.mxu0 0.0
    %207 = vmatprep.subr.mxu0 0.0
    %208 = vmatpush1.msra.mxu0 0.0
    %209 = vmatprep.subr.mxu0 0.0
    %210 = vmatpush1.msra.mxu0 0.0
    %211 = vmatprep.subr.mxu0 0.0
    %212 = vmatpush1.msra.mxu0 0.0
    %213 = vmatprep.subr.mxu0 0.0
    %214 = vmatpush1.msra.mxu0 0.0
    %215 = vmatprep.subr.mxu0 0.0
    %216 = vmatpush1.msra.mxu0 0.0
    %217 = vmatprep.subr.mxu0 0.0
    %218 = vmatpush1.msra.mxu0 0.0
    %219 = vmatprep.mubr.f32.mxu0 0.0
    %220 = vmatmul.mubr.f32.gmra.mrb[0].mxu0 %v147
    %v221 = vpop.f32.mrb[0].mxu0
    %v222 = vadd.f32 0.0, %v221
    %v223 = vpop.f32.mrb[0].mxu0
    %224 = vmatprep.mubr.f32.mxu0 0.0
    %225 = vmatmul.mubr.f32.gmra.mrb[0].mxu0 %v150
    %v226 = vpop.f32.mrb[0].mxu0
    %v227 = vadd.f32 0.0, %v226
    %v228 = vpop.f32.mrb[0].mxu0
    %229 = vmatprep.mubr.f32.mxu0 0.0
    %230 = vmatmul.mubr.f32.gmra.mrb[0].mxu0 %v153
    %v231 = vpop.f32.mrb[0].mxu0
    %v232 = vadd.f32 0.0, %v231
    %v233 = vpop.f32.mrb[0].mxu0
    %234 = vdwg.mxu0
    %v235 = vmax.f32 %v222, 0.0
    %v236 = vmax.f32 %v227, 0.0
    %v237 = vmax.f32 %v232, 0.0
    %s238 = scalar_lea.vmem [#allocation5], 48
    %v239 = vld [vmem:[%s238] sm:$0xff]
    %v240 = vld [vmem:[%s238 + $0x8] sm:$0xff]
    %v241 = vld [vmem:[%s238 + $0x10] sm:$0xff]
    %v243 = vsel %vm49, %v239, 0
    %v246 = vsel %vm49, %v240, 0
    %v249 = vsel %vm49, %v241, 0
    %251 = vmatprep.subr.mxu0 0.0
    %252 = vmatpush1.msra.mxu0 %v235
    %253 = vmatprep.subr.mxu0 0.0
    %254 = vmatpush1.msra.mxu0 %v236
    %255 = vmatprep.subr.mxu0 0.0
    %256 = vmatpush1.msra.mxu0 %v237
    %257 = vmatprep.subr.mxu0 0.0
    %258 = vmatpush1.msra.mxu0 0.0
    %259 = vmatprep.subr.mxu0 0.0
    %260 = vmatpush1.msra.mxu0 0.0
    %261 = vmatprep.subr.mxu0 0.0
    %262 = vmatpush1.msra.mxu0 0.0
    %263 = vmatprep.subr.mxu0 0.0
    %264 = vmatpush1.msra.mxu0 0.0
    %265 = vmatprep.subr.mxu0 0.0
    %266 = vmatpush1.msra.mxu0 0.0
    %267 = vmatprep.subr.mxu0 0.0
    %268 = vmatpush1.msra.mxu0 0.0
    %269 = vmatprep.subr.mxu0 0.0
    %270 = vmatpush1.msra.mxu0 0.0
    %271 = vmatprep.subr.mxu0 0.0
    %272 = vmatpush1.msra.mxu0 0.0
    %273 = vmatprep.subr.mxu0 0.0
    %274 = vmatpush1.msra.mxu0 0.0
    %275 = vmatprep.subr.mxu0 0.0
    %276 = vmatpush1.msra.mxu0 0.0
    %277 = vmatprep.subr.mxu0 0.0
    %278 = vmatpush1.msra.mxu0 0.0
    %279 = vmatprep.subr.mxu0 0.0
    %280 = vmatpush1.msra.mxu0 0.0
    %281 = vmatprep.subr.mxu0 0.0
    %282 = vmatpush1.msra.mxu0 0.0
    %283 = vmatprep.subr.mxu0 0.0
    %284 = vmatpush1.msra.mxu0 0.0
    %285 = vmatprep.subr.mxu0 0.0
    %286 = vmatpush1.msra.mxu0 0.0
    %287 = vmatprep.subr.mxu0 0.0
    %288 = vmatpush1.msra.mxu0 0.0
    %289 = vmatprep.subr.mxu0 0.0
    %290 = vmatpush1.msra.mxu0 0.0
    %291 = vmatprep.subr.mxu0 0.0
    %292 = vmatpush1.msra.mxu0 0.0
    %293 = vmatprep.subr.mxu0 0.0
    %294 = vmatpush1.msra.mxu0 0.0
    %295 = vmatprep.subr.mxu0 0.0
    %296 = vmatpush1.msra.mxu0 0.0
    %297 = vmatprep.subr.mxu0 0.0
    %298 = vmatpush1.msra.mxu0 0.0
    %299 = vmatprep.subr.mxu0 0.0
    %300 = vmatpush1.msra.mxu0 0.0
    %301 = vmatprep.subr.mxu0 0.0
    %302 = vmatpush1.msra.mxu0 0.0
    %303 = vmatprep.subr.mxu0 0.0
    %304 = vmatpush1.msra.mxu0 0.0
    %305 = vmatprep.subr.mxu0 0.0
    %306 = vmatpush1.msra.mxu0 0.0
    %307 = vmatprep.subr.mxu0 0.0
    %308 = vmatpush1.msra.mxu0 0.0
    %309 = vmatprep.subr.mxu0 0.0
    %310 = vmatpush1.msra.mxu0 0.0
    %311 = vmatprep.subr.mxu0 0.0
    %312 = vmatpush1.msra.mxu0 0.0
    %313 = vmatprep.subr.mxu0 0.0
    %314 = vmatpush1.msra.mxu0 0.0
    %315 = vmatprep.mubr.f32.mxu0 0.0
    %316 = vmatmul.mubr.f32.gmra.mrb[0].mxu0 %v243
    %v317 = vpop.f32.mrb[0].mxu0
    %v318 = vadd.f32 0.0, %v317
    %v319 = vpop.f32.mrb[0].mxu0
    %320 = vmatprep.mubr.f32.mxu0 0.0
    %321 = vmatmul.mubr.f32.gmra.mrb[0].mxu0 %v246
    %v322 = vpop.f32.mrb[0].mxu0
    %v323 = vadd.f32 0.0, %v322
    %v324 = vpop.f32.mrb[0].mxu0
    %325 = vmatprep.mubr.f32.mxu0 0.0
    %326 = vmatmul.mubr.f32.gmra.mrb[0].mxu0 %v249
    %v327 = vpop.f32.mrb[0].mxu0
    %v328 = vadd.f32 0.0, %v327
    %v329 = vpop.f32.mrb[0].mxu0
    %330 = vdwg.mxu0
    %v331 = vmax.f32 %v318, 0.0
    %v332 = vmax.f32 %v323, 0.0
    %v333 = vmax.f32 %v328, 0.0
    %s334 = scalar_lea.vmem [#allocation5], 72
    %v335 = vld [vmem:[%s334] sm:$0xff]
    %v336 = vld [vmem:[%s334 + $0x8] sm:$0xff]
    %v337 = vld [vmem:[%s334 + $0x10] sm:$0xff]
    %v339 = vsel %vm49, %v335, 0
    %v342 = vsel %vm49, %v336, 0
    %v345 = vsel %vm49, %v337, 0
    %347 = vmatprep.subr.mxu0 0.0
    %348 = vmatpush1.msra.mxu0 %v331
    %349 = vmatprep.subr.mxu0 0.0
    %350 = vmatpush1.msra.mxu0 %v332
    %351 = vmatprep.subr.mxu0 0.0
    %352 = vmatpush1.msra.mxu0 %v333
    %353 = vmatprep.subr.mxu0 0.0
    %354 = vmatpush1.msra.mxu0 0.0
    %355 = vmatprep.subr.mxu0 0.0
    %356 = vmatpush1.msra.mxu0 0.0
    %357 = vmatprep.subr.mxu0 0.0
    %358 = vmatpush1.msra.mxu0 0.0
    %359 = vmatprep.subr.mxu0 0.0
    %360 = vmatpush1.msra.mxu0 0.0
    %361 = vmatprep.subr.mxu0 0.0
    %362 = vmatpush1.msra.mxu0 0.0
    %363 = vmatprep.subr.mxu0 0.0
    %364 = vmatpush1.msra.mxu0 0.0
    %365 = vmatprep.subr.mxu0 0.0
    %366 = vmatpush1.msra.mxu0 0.0
    %367 = vmatprep.subr.mxu0 0.0
    %368 = vmatpush1.msra.mxu0 0.0
    %369 = vmatprep.subr.mxu0 0.0
    %370 = vmatpush1.msra.mxu0 0.0
    %371 = vmatprep.subr.mxu0 0.0
    %372 = vmatpush1.msra.mxu0 0.0
    %373 = vmatprep.subr.mxu0 0.0
    %374 = vmatpush1.msra.mxu0 0.0
    %375 = vmatprep.subr.mxu0 0.0
    %376 = vmatpush1.msra.mxu0 0.0
    %377 = vmatprep.subr.mxu0 0.0
    %378 = vmatpush1.msra.mxu0 0.0
    %379 = vmatprep.subr.mxu0 0.0
    %380 = vmatpush1.msra.mxu0 0.0
    %381 = vmatprep.subr.mxu0 0.0
    %382 = vmatpush1.msra.mxu0 0.0
    %383 = vmatprep.subr.mxu0 0.0
    %384 = vmatpush1.msra.mxu0 0.0
    %385 = vmatprep.subr.mxu0 0.0
    %386 = vmatpush1.msra.mxu0 0.0
    %387 = vmatprep.subr.mxu0 0.0
    %388 = vmatpush1.msra.mxu0 0.0
    %389 = vmatprep.subr.mxu0 0.0
    %390 = vmatpush1.msra.mxu0 0.0
    %391 = vmatprep.subr.mxu0 0.0
    %392 = vmatpush1.msra.mxu0 0.0
    %393 = vmatprep.subr.mxu0 0.0
    %394 = vmatpush1.msra.mxu0 0.0
    %395 = vmatprep.subr.mxu0 0.0
    %396 = vmatpush1.msra.mxu0 0.0
    %397 = vmatprep.subr.mxu0 0.0
    %398 = vmatpush1.msra.mxu0 0.0
    %399 = vmatprep.subr.mxu0 0.0
    %400 = vmatpush1.msra.mxu0 0.0
    %401 = vmatprep.subr.mxu0 0.0
    %402 = vmatpush1.msra.mxu0 0.0
    %403 = vmatprep.subr.mxu0 0.0
    %404 = vmatpush1.msra.mxu0 0.0
    %405 = vmatprep.subr.mxu0 0.0
    %406 = vmatpush1.msra.mxu0 0.0
    %407 = vmatprep.subr.mxu0 0.0
    %408 = vmatpush1.msra.mxu0 0.0
    %409 = vmatprep.subr.mxu0 0.0
    %410 = vmatpush1.msra.mxu0 0.0
    %411 = vmatprep.mubr.f32.mxu0 0.0
    %412 = vmatmul.mubr.f32.gmra.mrb[0].mxu0 %v339
    %v413 = vpop.f32.mrb[0].mxu0
    %v414 = vadd.f32 0.0, %v413
    %v415 = vpop.f32.mrb[0].mxu0
    %416 = vmatprep.mubr.f32.mxu0 0.0
    %417 = vmatmul.mubr.f32.gmra.mrb[0].mxu0 %v342
    %v418 = vpop.f32.mrb[0].mxu0
    %v419 = vadd.f32 0.0, %v418
    %v420 = vpop.f32.mrb[0].mxu0
    %421 = vmatprep.mubr.f32.mxu0 0.0
    %422 = vmatmul.mubr.f32.gmra.mrb[0].mxu0 %v345
    %v423 = vpop.f32.mrb[0].mxu0
    %v424 = vadd.f32 0.0, %v423
    %v425 = vpop.f32.mrb[0].mxu0
    %426 = vdwg.mxu0
    %v427 = vmax.f32 %v414, 0.0
    %v428 = vmax.f32 %v419, 0.0
    %v429 = vmax.f32 %v424, 0.0
    %s430 = scalar_lea.vmem [#allocation5], 96
    %v431 = vld [vmem:[%s430] sm:$0xff]
    %v432 = vld [vmem:[%s430 + $0x8] sm:$0xff]
    %v433 = vld [vmem:[%s430 + $0x10] sm:$0xff]
    %v435 = vsel %vm49, %v431, 0
    %v438 = vsel %vm49, %v432, 0
    %v441 = vsel %vm49, %v433, 0
    %443 = vmatprep.subr.mxu0 0.0
    %444 = vmatpush1.msra.mxu0 %v427
    %445 = vmatprep.subr.mxu0 0.0
    %446 = vmatpush1.msra.mxu0 %v428
    %447 = vmatprep.subr.mxu0 0.0
    %448 = vmatpush1.msra.mxu0 %v429
    %449 = vmatprep.subr.mxu0 0.0
    %450 = vmatpush1.msra.mxu0 0.0
    %451 = vmatprep.subr.mxu0 0.0
    %452 = vmatpush1.msra.mxu0 0.0
    %453 = vmatprep.subr.mxu0 0.0
    %454 = vmatpush1.msra.mxu0 0.0
    %455 = vmatprep.subr.mxu0 0.0
    %456 = vmatpush1.msra.mxu0 0.0
    %457 = vmatprep.subr.mxu0 0.0
    %458 = vmatpush1.msra.mxu0 0.0
    %459 = vmatprep.subr.mxu0 0.0
    %460 = vmatpush1.msra.mxu0 0.0
    %461 = vmatprep.subr.mxu0 0.0
    %462 = vmatpush1.msra.mxu0 0.0
    %463 = vmatprep.subr.mxu0 0.0
    %464 = vmatpush1.msra.mxu0 0.0
    %465 = vmatprep.subr.mxu0 0.0
    %466 = vmatpush1.msra.mxu0 0.0
    %467 = vmatprep.subr.mxu0 0.0
    %468 = vmatpush1.msra.mxu0 0.0
    %469 = vmatprep.subr.mxu0 0.0
    %470 = vmatpush1.msra.mxu0 0.0
    %471 = vmatprep.subr.mxu0 0.0
    %472 = vmatpush1.msra.mxu0 0.0
    %473 = vmatprep.subr.mxu0 0.0
    %474 = vmatpush1.msra.mxu0 0.0
    %475 = vmatprep.subr.mxu0 0.0
    %476 = vmatpush1.msra.mxu0 0.0
    %477 = vmatprep.subr.mxu0 0.0
    %478 = vmatpush1.msra.mxu0 0.0
    %479 = vmatprep.subr.mxu0 0.0
    %480 = vmatpush1.msra.mxu0 0.0
    %481 = vmatprep.subr.mxu0 0.0
    %482 = vmatpush1.msra.mxu0 0.0
    %483 = vmatprep.subr.mxu0 0.0
    %484 = vmatpush1.msra.mxu0 0.0
    %485 = vmatprep.subr.mxu0 0.0
    %486 = vmatpush1.msra.mxu0 0.0
    %487 = vmatprep.subr.mxu0 0.0
    %488 = vmatpush1.msra.mxu0 0.0
    %489 = vmatprep.subr.mxu0 0.0
    %490 = vmatpush1.msra.mxu0 0.0
    %491 = vmatprep.subr.mxu0 0.0
    %492 = vmatpush1.msra.mxu0 0.0
    %493 = vmatprep.subr.mxu0 0.0
    %494 = vmatpush1.msra.mxu0 0.0
    %495 = vmatprep.subr.mxu0 0.0
    %496 = vmatpush1.msra.mxu0 0.0
    %497 = vmatprep.subr.mxu0 0.0
    %498 = vmatpush1.msra.mxu0 0.0
    %499 = vmatprep.subr.mxu0 0.0
    %500 = vmatpush1.msra.mxu0 0.0
    %501 = vmatprep.subr.mxu0 0.0
    %502 = vmatpush1.msra.mxu0 0.0
    %503 = vmatprep.subr.mxu0 0.0
    %504 = vmatpush1.msra.mxu0 0.0
    %505 = vmatprep.subr.mxu0 0.0
    %506 = vmatpush1.msra.mxu0 0.0
    %507 = vmatprep.mubr.f32.mxu0 0.0
    %508 = vmatmul.mubr.f32.gmra.mrb[0].mxu0 %v435
    %v509 = vpop.f32.mrb[0].mxu0
    %v510 = vadd.f32 0.0, %v509
    %v511 = vpop.f32.mrb[0].mxu0
    %512 = vmatprep.mubr.f32.mxu0 0.0
    %513 = vmatmul.mubr.f32.gmra.mrb[0].mxu0 %v438
    %v514 = vpop.f32.mrb[0].mxu0
    %v515 = vadd.f32 0.0, %v514
    %v516 = vpop.f32.mrb[0].mxu0
    %517 = vmatprep.mubr.f32.mxu0 0.0
    %518 = vmatmul.mubr.f32.gmra.mrb[0].mxu0 %v441
    %v519 = vpop.f32.mrb[0].mxu0
    %v520 = vadd.f32 0.0, %v519
    %v521 = vpop.f32.mrb[0].mxu0
    %522 = vdwg.mxu0
    %v523 = vmax.f32 %v510, 0.0
    %v524 = vmax.f32 %v515, 0.0
    %v525 = vmax.f32 %v520, 0.0
    %526 = vst [vmem:[#allocation8] sm:$0xff] %v523
    %s527 = scalar_lea.vmem [#allocation5], 120
    %v528 = vld [vmem:[%s527] sm:$0xff]
    %v529 = vld [vmem:[%s527 + $0x8] sm:$0xff]
    %v530 = vld [vmem:[%s527 + $0x10] sm:$0xff]
    %v532 = vsel %vm49, %v528, 0
    %v535 = vsel %vm49, %v529, 0
    %v538 = vsel %vm49, %v530, 0
    %540 = vmatprep.subr.mxu0 0.0
    %541 = vmatpush1.msra.mxu0 %v523
    %542 = vmatprep.subr.mxu0 0.0
    %543 = vmatpush1.msra.mxu0 %v524
    %544 = vmatprep.subr.mxu0 0.0
    %545 = vmatpush1.msra.mxu0 %v525
    %546 = vmatprep.subr.mxu0 0.0
    %547 = vmatpush1.msra.mxu0 0.0
    %548 = vmatprep.subr.mxu0 0.0
    %549 = vmatpush1.msra.mxu0 0.0
    %550 = vmatprep.subr.mxu0 0.0
    %551 = vmatpush1.msra.mxu0 0.0
    %552 = vmatprep.subr.mxu0 0.0
    %553 = vmatpush1.msra.mxu0 0.0
    %554 = vmatprep.subr.mxu0 0.0
    %555 = vmatpush1.msra.mxu0 0.0
    %556 = vmatprep.subr.mxu0 0.0
    %557 = vmatpush1.msra.mxu0 0.0
    %558 = vmatprep.subr.mxu0 0.0
    %559 = vmatpush1.msra.mxu0 0.0
    %560 = vmatprep.subr.mxu0 0.0
    %561 = vmatpush1.msra.mxu0 0.0
    %562 = vmatprep.subr.mxu0 0.0
    %563 = vmatpush1.msra.mxu0 0.0
    %564 = vmatprep.subr.mxu0 0.0
    %565 = vmatpush1.msra.mxu0 0.0
    %566 = vmatprep.subr.mxu0 0.0
    %567 = vmatpush1.msra.mxu0 0.0
    %568 = vmatprep.subr.mxu0 0.0
    %569 = vmatpush1.msra.mxu0 0.0
    %570 = vmatprep.subr.mxu0 0.0
    %571 = vmatpush1.msra.mxu0 0.0
    %572 = vmatprep.subr.mxu0 0.0
    %573 = vmatpush1.msra.mxu0 0.0
    %574 = vmatprep.subr.mxu0 0.0
    %575 = vmatpush1.msra.mxu0 0.0
    %576 = vmatprep.subr.mxu0 0.0
    %577 = vmatpush1.msra.mxu0 0.0
    %578 = vmatprep.subr.mxu0 0.0
    %579 = vmatpush1.msra.mxu0 0.0
    %580 = vmatprep.subr.mxu0 0.0
    %581 = vmatpush1.msra.mxu0 0.0
    %582 = vmatprep.subr.mxu0 0.0
    %583 = vmatpush1.msra.mxu0 0.0
    %584 = vmatprep.subr.mxu0 0.0
    %585 = vmatpush1.msra.mxu0 0.0
    %586 = vmatprep.subr.mxu0 0.0
    %587 = vmatpush1.msra.mxu0 0.0
    %588 = vmatprep.subr.mxu0 0.0
    %589 = vmatpush1.msra.mxu0 0.0
    %590 = vmatprep.subr.mxu0 0.0
    %591 = vmatpush1.msra.mxu0 0.0
    %592 = vmatprep.subr.mxu0 0.0
    %593 = vmatpush1.msra.mxu0 0.0
    %594 = vmatprep.subr.mxu0 0.0
    %595 = vmatpush1.msra.mxu0 0.0
    %596 = vmatprep.subr.mxu0 0.0
    %597 = vmatpush1.msra.mxu0 0.0
    %598 = vmatprep.subr.mxu0 0.0
    %599 = vmatpush1.msra.mxu0 0.0
    %600 = vmatprep.subr.mxu0 0.0
    %601 = vmatpush1.msra.mxu0 0.0
    %602 = vmatprep.subr.mxu0 0.0
    %603 = vmatpush1.msra.mxu0 0.0
    %604 = vmatprep.mubr.f32.mxu0 0.0
    %605 = vmatmul.mubr.f32.gmra.mrb[0].mxu0 %v532
    %v606 = vpop.f32.mrb[0].mxu0
    %v607 = vadd.f32 0.0, %v606
    %v608 = vpop.f32.mrb[0].mxu0
    %609 = vmatprep.mubr.f32.mxu0 0.0
    %610 = vmatmul.mubr.f32.gmra.mrb[0].mxu0 %v535
    %v611 = vpop.f32.mrb[0].mxu0
    %v612 = vadd.f32 0.0, %v611
    %v613 = vpop.f32.mrb[0].mxu0
    %614 = vmatprep.mubr.f32.mxu0 0.0
    %615 = vmatmul.mubr.f32.gmra.mrb[0].mxu0 %v538
    %v616 = vpop.f32.mrb[0].mxu0
    %v617 = vadd.f32 0.0, %v616
    %v618 = vpop.f32.mrb[0].mxu0
    %619 = vdwg.mxu0
    %v620 = vmax.f32 %v607, 0.0
    %v621 = vmax.f32 %v612, 0.0
    %v622 = vmax.f32 %v617, 0.0
    %s623 = scalar_lea.vmem [#allocation5], 144
    %v624 = vld [vmem:[%s623] sm:$0xff]
    %v625 = vld [vmem:[%s623 + $0x8] sm:$0xff]
    %v626 = vld [vmem:[%s623 + $0x10] sm:$0xff]
    %v628 = vsel %vm49, %v624, 0
    %v631 = vsel %vm49, %v625, 0
    %v634 = vsel %vm49, %v626, 0
    %636 = vmatprep.subr.mxu0 0.0
    %637 = vmatpush1.msra.mxu0 %v620
    %638 = vmatprep.subr.mxu0 0.0
    %639 = vmatpush1.msra.mxu0 %v621
    %640 = vmatprep.subr.mxu0 0.0
    %641 = vmatpush1.msra.mxu0 %v622
    %642 = vmatprep.subr.mxu0 0.0
    %643 = vmatpush1.msra.mxu0 0.0
    %644 = vmatprep.subr.mxu0 0.0
    %645 = vmatpush1.msra.mxu0 0.0
    %646 = vmatprep.subr.mxu0 0.0
    %647 = vmatpush1.msra.mxu0 0.0
    %648 = vmatprep.subr.mxu0 0.0
    %649 = vmatpush1.msra.mxu0 0.0
    %650 = vmatprep.subr.mxu0 0.0
    %651 = vmatpush1.msra.mxu0 0.0
    %652 = vmatprep.subr.mxu0 0.0
    %653 = vmatpush1.msra.mxu0 0.0
    %654 = vmatprep.subr.mxu0 0.0
    %655 = vmatpush1.msra.mxu0 0.0
    %656 = vmatprep.subr.mxu0 0.0
    %657 = vmatpush1.msra.mxu0 0.0
    %658 = vmatprep.subr.mxu0 0.0
    %659 = vmatpush1.msra.mxu0 0.0
    %660 = vmatprep.subr.mxu0 0.0
    %661 = vmatpush1.msra.mxu0 0.0
    %662 = vmatprep.subr.mxu0 0.0
    %663 = vmatpush1.msra.mxu0 0.0
    %664 = vmatprep.subr.mxu0 0.0
    %665 = vmatpush1.msra.mxu0 0.0
    %666 = vmatprep.subr.mxu0 0.0
    %667 = vmatpush1.msra.mxu0 0.0
    %668 = vmatprep.subr.mxu0 0.0
    %669 = vmatpush1.msra.mxu0 0.0
    %670 = vmatprep.subr.mxu0 0.0
    %671 = vmatpush1.msra.mxu0 0.0
    %672 = vmatprep.subr.mxu0 0.0
    %673 = vmatpush1.msra.mxu0 0.0
    %674 = vmatprep.subr.mxu0 0.0
    %675 = vmatpush1.msra.mxu0 0.0
    %676 = vmatprep.subr.mxu0 0.0
    %677 = vmatpush1.msra.mxu0 0.0
    %678 = vmatprep.subr.mxu0 0.0
    %679 = vmatpush1.msra.mxu0 0.0
    %680 = vmatprep.subr.mxu0 0.0
    %681 = vmatpush1.msra.mxu0 0.0
    %682 = vmatprep.subr.mxu0 0.0
    %683 = vmatpush1.msra.mxu0 0.0
    %684 = vmatprep.subr.mxu0 0.0
    %685 = vmatpush1.msra.mxu0 0.0
    %686 = vmatprep.subr.mxu0 0.0
    %687 = vmatpush1.msra.mxu0 0.0
    %688 = vmatprep.subr.mxu0 0.0
    %689 = vmatpush1.msra.mxu0 0.0
    %690 = vmatprep.subr.mxu0 0.0
    %691 = vmatpush1.msra.mxu0 0.0
    %692 = vmatprep.subr.mxu0 0.0
    %693 = vmatpush1.msra.mxu0 0.0
    %694 = vmatprep.subr.mxu0 0.0
    %695 = vmatpush1.msra.mxu0 0.0
    %696 = vmatprep.subr.mxu0 0.0
    %697 = vmatpush1.msra.mxu0 0.0
    %698 = vmatprep.subr.mxu0 0.0
    %699 = vmatpush1.msra.mxu0 0.0
    %700 = vmatprep.mubr.f32.mxu0 0.0
    %701 = vmatmul.mubr.f32.gmra.mrb[0].mxu0 %v628
    %v702 = vpop.f32.mrb[0].mxu0
    %v703 = vadd.f32 0.0, %v702
    %v704 = vpop.f32.mrb[0].mxu0
    %705 = vmatprep.mubr.f32.mxu0 0.0
    %706 = vmatmul.mubr.f32.gmra.mrb[0].mxu0 %v631
    %v707 = vpop.f32.mrb[0].mxu0
    %v708 = vadd.f32 0.0, %v707
    %v709 = vpop.f32.mrb[0].mxu0
    %710 = vmatprep.mubr.f32.mxu0 0.0
    %711 = vmatmul.mubr.f32.gmra.mrb[0].mxu0 %v634
    %v712 = vpop.f32.mrb[0].mxu0
    %v713 = vadd.f32 0.0, %v712
    %v714 = vpop.f32.mrb[0].mxu0
    %715 = vdwg.mxu0
    %v716 = vmax.f32 %v703, 0.0
    %v717 = vmax.f32 %v708, 0.0
    %v718 = vmax.f32 %v713, 0.0
    %s719 = scalar_lea.vmem [#allocation5], 168
    %v720 = vld [vmem:[%s719] sm:$0xff]
    %v721 = vld [vmem:[%s719 + $0x8] sm:$0xff]
    %v722 = vld [vmem:[%s719 + $0x10] sm:$0xff]
    %v724 = vsel %vm49, %v720, 0
    %v727 = vsel %vm49, %v721, 0
    %v730 = vsel %vm49, %v722, 0
    %732 = vmatprep.subr.mxu0 0.0
    %733 = vmatpush1.msra.mxu0 %v716
    %734 = vmatprep.subr.mxu0 0.0
    %735 = vmatpush1.msra.mxu0 %v717
    %736 = vmatprep.subr.mxu0 0.0
    %737 = vmatpush1.msra.mxu0 %v718
    %738 = vmatprep.subr.mxu0 0.0
    %739 = vmatpush1.msra.mxu0 0.0
    %740 = vmatprep.subr.mxu0 0.0
    %741 = vmatpush1.msra.mxu0 0.0
    %742 = vmatprep.subr.mxu0 0.0
    %743 = vmatpush1.msra.mxu0 0.0
    %744 = vmatprep.subr.mxu0 0.0
    %745 = vmatpush1.msra.mxu0 0.0
    %746 = vmatprep.subr.mxu0 0.0
    %747 = vmatpush1.msra.mxu0 0.0
    %748 = vmatprep.subr.mxu0 0.0
    %749 = vmatpush1.msra.mxu0 0.0
    %750 = vmatprep.subr.mxu0 0.0
    %751 = vmatpush1.msra.mxu0 0.0
    %752 = vmatprep.subr.mxu0 0.0
    %753 = vmatpush1.msra.mxu0 0.0
    %754 = vmatprep.subr.mxu0 0.0
    %755 = vmatpush1.msra.mxu0 0.0
    %756 = vmatprep.subr.mxu0 0.0
    %757 = vmatpush1.msra.mxu0 0.0
    %758 = vmatprep.subr.mxu0 0.0
    %759 = vmatpush1.msra.mxu0 0.0
    %760 = vmatprep.subr.mxu0 0.0
    %761 = vmatpush1.msra.mxu0 0.0
    %762 = vmatprep.subr.mxu0 0.0
    %763 = vmatpush1.msra.mxu0 0.0
    %764 = vmatprep.subr.mxu0 0.0
    %765 = vmatpush1.msra.mxu0 0.0
    %766 = vmatprep.subr.mxu0 0.0
    %767 = vmatpush1.msra.mxu0 0.0
    %768 = vmatprep.subr.mxu0 0.0
    %769 = vmatpush1.msra.mxu0 0.0
    %770 = vmatprep.subr.mxu0 0.0
    %771 = vmatpush1.msra.mxu0 0.0
    %772 = vmatprep.subr.mxu0 0.0
    %773 = vmatpush1.msra.mxu0 0.0
    %774 = vmatprep.subr.mxu0 0.0
    %775 = vmatpush1.msra.mxu0 0.0
    %776 = vmatprep.subr.mxu0 0.0
    %777 = vmatpush1.msra.mxu0 0.0
    %778 = vmatprep.subr.mxu0 0.0
    %779 = vmatpush1.msra.mxu0 0.0
    %780 = vmatprep.subr.mxu0 0.0
    %781 = vmatpush1.msra.mxu0 0.0
    %782 = vmatprep.subr.mxu0 0.0
    %783 = vmatpush1.msra.mxu0 0.0
    %784 = vmatprep.subr.mxu0 0.0
    %785 = vmatpush1.msra.mxu0 0.0
    %786 = vmatprep.subr.mxu0 0.0
    %787 = vmatpush1.msra.mxu0 0.0
    %788 = vmatprep.subr.mxu0 0.0
    %789 = vmatpush1.msra.mxu0 0.0
    %790 = vmatprep.subr.mxu0 0.0
    %791 = vmatpush1.msra.mxu0 0.0
    %792 = vmatprep.subr.mxu0 0.0
    %793 = vmatpush1.msra.mxu0 0.0
    %794 = vmatprep.subr.mxu0 0.0
    %795 = vmatpush1.msra.mxu0 0.0
    %796 = vmatprep.mubr.f32.mxu0 0.0
    %797 = vmatmul.mubr.f32.gmra.mrb[0].mxu0 %v724
    %v798 = vpop.f32.mrb[0].mxu0
    %v799 = vadd.f32 0.0, %v798
    %v800 = vpop.f32.mrb[0].mxu0
    %801 = vmatprep.mubr.f32.mxu0 0.0
    %802 = vmatmul.mubr.f32.gmra.mrb[0].mxu0 %v727
    %v803 = vpop.f32.mrb[0].mxu0
    %v804 = vadd.f32 0.0, %v803
    %v805 = vpop.f32.mrb[0].mxu0
    %806 = vmatprep.mubr.f32.mxu0 0.0
    %807 = vmatmul.mubr.f32.gmra.mrb[0].mxu0 %v730
    %v808 = vpop.f32.mrb[0].mxu0
    %v809 = vadd.f32 0.0, %v808
    %v810 = vpop.f32.mrb[0].mxu0
    %811 = vdwg.mxu0
    %v812 = vmax.f32 %v799, 0.0
    %v813 = vmax.f32 %v804, 0.0
    %v814 = vmax.f32 %v809, 0.0
    %s815 = scalar_lea.vmem [#allocation5], 192
    %v816 = vld [vmem:[%s815] sm:$0xff]
    %v817 = vld [vmem:[%s815 + $0x8] sm:$0xff]
    %v818 = vld [vmem:[%s815 + $0x10] sm:$0xff]
    %v820 = vsel %vm49, %v816, 0
    %v823 = vsel %vm49, %v817, 0
    %v826 = vsel %vm49, %v818, 0
    %828 = vmatprep.subr.mxu0 0.0
    %829 = vmatpush1.msra.mxu0 %v812
    %830 = vmatprep.subr.mxu0 0.0
    %831 = vmatpush1.msra.mxu0 %v813
    %832 = vmatprep.subr.mxu0 0.0
    %833 = vmatpush1.msra.mxu0 %v814
    %834 = vmatprep.subr.mxu0 0.0
    %835 = vmatpush1.msra.mxu0 0.0
    %836 = vmatprep.subr.mxu0 0.0
    %837 = vmatpush1.msra.mxu0 0.0
    %838 = vmatprep.subr.mxu0 0.0
    %839 = vmatpush1.msra.mxu0 0.0
    %840 = vmatprep.subr.mxu0 0.0
    %841 = vmatpush1.msra.mxu0 0.0
    %842 = vmatprep.subr.mxu0 0.0
    %843 = vmatpush1.msra.mxu0 0.0
    %844 = vmatprep.subr.mxu0 0.0
    %845 = vmatpush1.msra.mxu0 0.0
    %846 = vmatprep.subr.mxu0 0.0
    %847 = vmatpush1.msra.mxu0 0.0
    %848 = vmatprep.subr.mxu0 0.0
    %849 = vmatpush1.msra.mxu0 0.0
    %850 = vmatprep.subr.mxu0 0.0
    %851 = vmatpush1.msra.mxu0 0.0
    %852 = vmatprep.subr.mxu0 0.0
    %853 = vmatpush1.msra.mxu0 0.0
    %854 = vmatprep.subr.mxu0 0.0
    %855 = vmatpush1.msra.mxu0 0.0
    %856 = vmatprep.subr.mxu0 0.0
    %857 = vmatpush1.msra.mxu0 0.0
    %858 = vmatprep.subr.mxu0 0.0
    %859 = vmatpush1.msra.mxu0 0.0
    %860 = vmatprep.subr.mxu0 0.0
    %861 = vmatpush1.msra.mxu0 0.0
    %862 = vmatprep.subr.mxu0 0.0
    %863 = vmatpush1.msra.mxu0 0.0
    %864 = vmatprep.subr.mxu0 0.0
    %865 = vmatpush1.msra.mxu0 0.0
    %866 = vmatprep.subr.mxu0 0.0
    %867 = vmatpush1.msra.mxu0 0.0
    %868 = vmatprep.subr.mxu0 0.0
    %869 = vmatpush1.msra.mxu0 0.0
    %870 = vmatprep.subr.mxu0 0.0
    %871 = vmatpush1.msra.mxu0 0.0
    %872 = vmatprep.subr.mxu0 0.0
    %873 = vmatpush1.msra.mxu0 0.0
    %874 = vmatprep.subr.mxu0 0.0
    %875 = vmatpush1.msra.mxu0 0.0
    %876 = vmatprep.subr.mxu0 0.0
    %877 = vmatpush1.msra.mxu0 0.0
    %878 = vmatprep.subr.mxu0 0.0
    %879 = vmatpush1.msra.mxu0 0.0
    %880 = vmatprep.subr.mxu0 0.0
    %881 = vmatpush1.msra.mxu0 0.0
    %882 = vmatprep.subr.mxu0 0.0
    %883 = vmatpush1.msra.mxu0 0.0
    %884 = vmatprep.subr.mxu0 0.0
    %885 = vmatpush1.msra.mxu0 0.0
    %886 = vmatprep.subr.mxu0 0.0
    %887 = vmatpush1.msra.mxu0 0.0
    %888 = vmatprep.subr.mxu0 0.0
    %889 = vmatpush1.msra.mxu0 0.0
    %890 = vmatprep.subr.mxu0 0.0
    %891 = vmatpush1.msra.mxu0 0.0
    %892 = vmatprep.mubr.f32.mxu0 0.0
    %893 = vmatmul.mubr.f32.gmra.mrb[0].mxu0 %v820
    %v894 = vpop.f32.mrb[0].mxu0
    %v895 = vadd.f32 0.0, %v894
    %v896 = vpop.f32.mrb[0].mxu0
    %897 = vmatprep.mubr.f32.mxu0 0.0
    %898 = vmatmul.mubr.f32.gmra.mrb[0].mxu0 %v823
    %v899 = vpop.f32.mrb[0].mxu0
    %v900 = vadd.f32 0.0, %v899
    %v901 = vpop.f32.mrb[0].mxu0
    %902 = vmatprep.mubr.f32.mxu0 0.0
    %903 = vmatmul.mubr.f32.gmra.mrb[0].mxu0 %v826
    %v904 = vpop.f32.mrb[0].mxu0
    %v905 = vadd.f32 0.0, %v904
    %v906 = vpop.f32.mrb[0].mxu0
    %907 = vdwg.mxu0
    %v908 = vmax.f32 %v895, 0.0
    %v909 = vmax.f32 %v900, 0.0
    %v910 = vmax.f32 %v905, 0.0
    %s911 = scalar_lea.vmem [#allocation5], 216
    %v912 = vld [vmem:[%s911] sm:$0xff]
    %v913 = vld [vmem:[%s911 + $0x8] sm:$0xff]
    %v914 = vld [vmem:[%s911 + $0x10] sm:$0xff]
    %v916 = vsel %vm49, %v912, 0
    %v919 = vsel %vm49, %v913, 0
    %v922 = vsel %vm49, %v914, 0
    %924 = vmatprep.subr.mxu0 0.0
    %925 = vmatpush1.msra.mxu0 %v908
    %926 = vmatprep.subr.mxu0 0.0
    %927 = vmatpush1.msra.mxu0 %v909
    %928 = vmatprep.subr.mxu0 0.0
    %929 = vmatpush1.msra.mxu0 %v910
    %930 = vmatprep.subr.mxu0 0.0
    %931 = vmatpush1.msra.mxu0 0.0
    %932 = vmatprep.subr.mxu0 0.0
    %933 = vmatpush1.msra.mxu0 0.0
    %934 = vmatprep.subr.mxu0 0.0
    %935 = vmatpush1.msra.mxu0 0.0
    %936 = vmatprep.subr.mxu0 0.0
    %937 = vmatpush1.msra.mxu0 0.0
    %938 = vmatprep.subr.mxu0 0.0
    %939 = vmatpush1.msra.mxu0 0.0
    %940 = vmatprep.subr.mxu0 0.0
    %941 = vmatpush1.msra.mxu0 0.0
    %942 = vmatprep.subr.mxu0 0.0
    %943 = vmatpush1.msra.mxu0 0.0
    %944 = vmatprep.subr.mxu0 0.0
    %945 = vmatpush1.msra.mxu0 0.0
    %946 = vmatprep.subr.mxu0 0.0
    %947 = vmatpush1.msra.mxu0 0.0
    %948 = vmatprep.subr.mxu0 0.0
    %949 = vmatpush1.msra.mxu0 0.0
    %950 = vmatprep.subr.mxu0 0.0
    %951 = vmatpush1.msra.mxu0 0.0
    %952 = vmatprep.subr.mxu0 0.0
    %953 = vmatpush1.msra.mxu0 0.0
    %954 = vmatprep.subr.mxu0 0.0
    %955 = vmatpush1.msra.mxu0 0.0
    %956 = vmatprep.subr.mxu0 0.0
    %957 = vmatpush1.msra.mxu0 0.0
    %958 = vmatprep.subr.mxu0 0.0
    %959 = vmatpush1.msra.mxu0 0.0
    %960 = vmatprep.subr.mxu0 0.0
    %961 = vmatpush1.msra.mxu0 0.0
    %962 = vmatprep.subr.mxu0 0.0
    %963 = vmatpush1.msra.mxu0 0.0
    %964 = vmatprep.subr.mxu0 0.0
    %965 = vmatpush1.msra.mxu0 0.0
    %966 = vmatprep.subr.mxu0 0.0
    %967 = vmatpush1.msra.mxu0 0.0
    %968 = vmatprep.subr.mxu0 0.0
    %969 = vmatpush1.msra.mxu0 0.0
    %970 = vmatprep.subr.mxu0 0.0
    %971 = vmatpush1.msra.mxu0 0.0
    %972 = vmatprep.subr.mxu0 0.0
    %973 = vmatpush1.msra.mxu0 0.0
    %974 = vmatprep.subr.mxu0 0.0
    %975 = vmatpush1.msra.mxu0 0.0
    %976 = vmatprep.subr.mxu0 0.0
    %977 = vmatpush1.msra.mxu0 0.0
    %978 = vmatprep.subr.mxu0 0.0
    %979 = vmatpush1.msra.mxu0 0.0
    %980 = vmatprep.subr.mxu0 0.0
    %981 = vmatpush1.msra.mxu0 0.0
    %982 = vmatprep.subr.mxu0 0.0
    %983 = vmatpush1.msra.mxu0 0.0
    %984 = vmatprep.subr.mxu0 0.0
    %985 = vmatpush1.msra.mxu0 0.0
    %986 = vmatprep.subr.mxu0 0.0
    %987 = vmatpush1.msra.mxu0 0.0
    %988 = vmatprep.mubr.f32.mxu0 0.0
    %989 = vmatmul.mubr.f32.gmra.mrb[0].mxu0 %v916
    %v990 = vpop.f32.mrb[0].mxu0
    %v991 = vadd.f32 0.0, %v990
    %v992 = vpop.f32.mrb[0].mxu0
    %993 = vmatprep.mubr.f32.mxu0 0.0
    %994 = vmatmul.mubr.f32.gmra.mrb[0].mxu0 %v919
    %v995 = vpop.f32.mrb[0].mxu0
    %v996 = vadd.f32 0.0, %v995
    %v997 = vpop.f32.mrb[0].mxu0
    %998 = vmatprep.mubr.f32.mxu0 0.0
    %999 = vmatmul.mubr.f32.gmra.mrb[0].mxu0 %v922
    %v1000 = vpop.f32.mrb[0].mxu0
    %v1001 = vpop.f32.mrb[0].mxu0
    %1002 = vdwg.mxu0
    %1003 = vst [vmem:[#allocation7] sm:$0xff] %v991
    %1004 = vst [vmem:[#allocation7 + $0x8] sm:$0xff] %v996
    // Predicated region
    $region18: #{tpu_custom_call.1} parent=1 // pred_check
      _
    $region19: #{tpu_custom_call.1} parent=1 // pred_check_branch
      %1006 = sbr.rel (0) target = $region21
    $region20: #{tpu_custom_call.1} parent=1 // pred_region
      %s1008 = ssub.s32 256, 256
      %1009 = vsyncadd [#allocation4], %s1008
      %s1010 = sshll.u32 [#allocation7], 4
      %s1011 = int_to_ptr.vmem [resolvable:$true] %s1010
      %1016 = dma.vmem_to_hbm [thread:$0]  %s1011, 256, %s2, [#allocation4], 128, 128, 8
    $region21: #{tpu_custom_call.1} parent=1 // pred_fallthru
      _
    // Predicated region
    $region22: #{tpu_custom_call.1} parent=1 // pred_check
      _
    $region23: #{tpu_custom_call.1} parent=1 // pred_check_branch
      %1018 = sbr.rel (0) target = $region25
    $region24: #{tpu_custom_call.1} parent=1 // pred_region
      %s1020 = ssub.s32 128, 128
      %1021 = vsyncadd [#allocation9], %s1020
      %s1023 = sshll.u32 [#allocation8], 4
      %s1024 = int_to_ptr.vmem [resolvable:$true] %s1023
      %1026 = dma.vmem_to_hbm [thread:$0]  %s1024, 128, %s3, [#allocation9]
    $region25: #{tpu_custom_call.1} parent=1 // pred_fallthru
      _
    // Predicated region
    $region26: #{tpu_custom_call.1} parent=1 // pred_check
      _
    $region27: #{tpu_custom_call.1} parent=1 // pred_check_branch
      %1028 = sbr.rel (0) target = $region29
    $region28: #{tpu_custom_call.1} parent=1 // pred_region
      %1029 = dma.done [#allocation4], 256
    $region29: #{tpu_custom_call.1} parent=1 // pred_fallthru
      _
    // Predicated region
    $region30: #{tpu_custom_call.1} parent=1 // pred_check
      _
    $region31: #{tpu_custom_call.1} parent=1 // pred_check_branch
      %1031 = sbr.rel (0) target = $region33
    $region32: #{tpu_custom_call.1} parent=1 // pred_region
      %1032 = dma.done [#allocation9], 128
    $region33: #{tpu_custom_call.1} parent=1 // pred_fallthru
      _
    %1033 = vsyncpa [#allocation3], 1
    %1034 = vsyncpa [#allocation6], 1
    %1035 = vsyncpa [#allocation4], 1
    %1036 = vsyncpa [#allocation9], 1

</llo_original>
